<compile_context>
chip_gen: v5e
topology: v5e:2x2
jax: 0.10.0
libtpu: 0.0.40
codegen_flags: <defaults>
</compile_context>

<pallas_src>
import functools

import jax
import jax.numpy as jnp
from jax.experimental import pallas as pl
from jax.experimental.pallas import tpu as pltpu

LANE = 128


def _round_up(x, m):
    return ((x + m - 1) // m) * m


def channel_attention_kernel(x_ref, w1_ref, b1_ref, w2_ref, b2_ref, o_ref,
                             sum_acc, max_acc, *, hw, hw_tile, num_k):
    # x_ref:  (1, C, hw_tile)  current batch row / spatial tile (VMEM)
    # w1:(C,mid) b1:(1,mid) w2:(mid,C) b2:(1,C)  VMEM-resident (constant index)
    # o_ref:  (1, 1, C)
    # sum_acc/max_acc: (1, C, LANE) f32 scratch, live across the HW grid axis.
    k = pl.program_id(1)
    last_k = num_k - 1
    n_chunks = hw_tile // LANE

    @pl.when(k == 0)
    def _init():
        sum_acc[...] = jnp.zeros(sum_acc.shape, sum_acc.dtype)
        max_acc[...] = jnp.full(max_acc.shape, -jnp.inf, dtype=max_acc.dtype)

    def load_chunk(start):
        if not isinstance(start, int):
            start = pl.multiple_of(start, LANE)
        return x_ref[:, :, pl.ds(start, LANE)].astype(jnp.float32)

    def fold_pair(c0, c1):
        # One accumulator RMW per two input chunks (relieves the vst slot).
        sum_acc[...] = sum_acc[...] + (c0 + c1)
        max_acc[...] = jnp.maximum(max_acc[...], jnp.maximum(c0, c1))

    def fold_single(c):
        sum_acc[...] = sum_acc[...] + c
        max_acc[...] = jnp.maximum(max_acc[...], c)

    def fold_chunks(count):
        # Fold `count` (static int) fully-valid 128-lane chunks of this tile.
        if count <= 0:
            return
        n_pairs = count // 2
        if 0 < n_pairs <= 8:
            for p in range(n_pairs):
                fold_pair(load_chunk(2 * p * LANE),
                          load_chunk((2 * p + 1) * LANE))
        elif n_pairs > 8:
            def body(p, carry):
                base = p * (2 * LANE)
                fold_pair(load_chunk(base), load_chunk(base + LANE))
                return carry
            jax.lax.fori_loop(0, n_pairs, body, 0, unroll=4)
        if count % 2:
            fold_single(load_chunk((count - 1) * LANE))

    ragged = (hw % hw_tile) != 0

    if not ragged:
        fold_chunks(n_chunks)
    else:
        # Tail-tile geometry is static (num_k, hw, hw_tile are Python ints).
        remaining = hw - last_k * hw_tile       # valid lanes in the last tile
        tail_full = remaining // LANE           # fully-valid chunks
        tail_rem = remaining % LANE             # lanes in the partial chunk

        if num_k > 1:
            @pl.when(k != last_k)
            def _full_tile():                   # hot path: no masking at all
                fold_chunks(n_chunks)

        @pl.when(k == last_k)
        def _tail_tile():
            fold_chunks(tail_full)
            if tail_rem > 0:
                chunk = load_chunk(tail_full * LANE)
                lane_pos = jax.lax.broadcasted_iota(jnp.int32, chunk.shape, 2)
                valid = lane_pos < tail_rem
                sum_acc[...] = sum_acc[...] + jnp.where(valid, chunk, 0.0)
                max_acc[...] = jnp.maximum(max_acc[...],
                                           jnp.where(valid, chunk, -jnp.inf))
            # Chunks past the valid region are never read.

    @pl.when(k == last_k)
    def _finalize():
        # Single cross-lane reduce per pool; divide by the *global* H*W.
        avg_pool = jnp.sum(sum_acc[...], axis=-1) / float(hw)    # (1, C)
        max_pool = jnp.max(max_acc[...], axis=-1)                # (1, C)

        # Build the (2, C) pool matrix without sublane concatenation.
        C = avg_pool.shape[1]
        row = jax.lax.broadcasted_iota(jnp.int32, (2, C), 0)
        pools = jnp.where(row == 0,
                          jnp.broadcast_to(avg_pool, (2, C)),
                          jnp.broadcast_to(max_pool, (2, C)))    # (2, C)

        # Fused bottleneck MLP: both pools in 2 MXU dots.
        h = jnp.dot(pools, w1_ref[...],
                    preferred_element_type=jnp.float32) + b1_ref[...]
        h = jnp.maximum(h, 0.0)                                  # ReLU
        y = jnp.dot(h, w2_ref[...],
                    preferred_element_type=jnp.float32) + b2_ref[...]  # (2, C)

        pool_sum = jnp.sum(y, axis=0, keepdims=True)             # (1, C)
        o_ref[...] = jax.nn.sigmoid(pool_sum).reshape(1, 1, C).astype(o_ref.dtype)


def channel_attention(x, w1, b1, w2, b2, *, hw_tile=None,
                      block_byte_target=4 << 20):
    """x: (B, C, H, W) NCHW (f32 or bf16). Returns sigmoid gate of shape (B, C, 1, 1)."""
    B, C, H, W = x.shape
    HW = H * W
    C_w, mid = w1.shape
    assert C_w == C

    dt_bytes = jnp.dtype(x.dtype).itemsize

    # Tile sizing: target ~block_byte_target bytes per (1, C, hw_tile) x block so
    # each grid step's DMA amortizes the fixed per-step overhead, but never wider
    # than the (lane-rounded) spatial extent.
    hw_ceiling = _round_up(HW, LANE)
    if hw_tile is None:
        hw_tile = block_byte_target // max(1, C * dt_bytes)
    hw_tile = max(LANE, (int(hw_tile) // LANE) * LANE)
    hw_tile = min(hw_tile, hw_ceiling)
    num_k = pl.cdiv(HW, hw_tile)

    # No padding copy: the trailing grid step is a partial block and the kernel
    # masks / skips the invalid lanes itself.
    x_flat = x.reshape(B, C, HW)

    kernel = functools.partial(channel_attention_kernel,
                               hw=HW, hw_tile=hw_tile, num_k=num_k)

    # VMEM budget: double-buffered x blocks + (double-buffered) tiny weights +
    # accumulator scratch + output, with ~25% headroom and sublane padding.
    c_pad = _round_up(C, 8)
    block_bytes = c_pad * hw_tile * dt_bytes
    weight_bytes = sum(int(a.size) * jnp.dtype(a.dtype).itemsize
                       for a in (w1, b1, w2, b2))
    scratch_bytes = 2 * c_pad * LANE * 4
    out_bytes = c_pad * max(dt_bytes, 4)
    needed = 2 * block_bytes + 2 * weight_bytes + scratch_bytes + 2 * out_bytes
    vmem_limit = int(min(max(int(needed * 1.25) + (1 << 20), 4 << 20), 48 << 20))

    out = pl.pallas_call(
        kernel,
        out_shape=jax.ShapeDtypeStruct((B, 1, C), x.dtype),
        grid_spec=pltpu.PrefetchScalarGridSpec(
            num_scalar_prefetch=0,
            grid=(B, num_k),
            in_specs=[
                pl.BlockSpec((1, C, hw_tile), lambda b, k: (b, 0, k)),
                pl.BlockSpec((C, mid), lambda b, k: (0, 0)),   # weights stay
                pl.BlockSpec((1, mid), lambda b, k: (0, 0)),   # VMEM-resident
                pl.BlockSpec((mid, C), lambda b, k: (0, 0)),   # across the HW
                pl.BlockSpec((1, C), lambda b, k: (0, 0)),     # grid axis
            ],
            out_specs=pl.BlockSpec((1, 1, C), lambda b, k: (b, 0, 0)),
            scratch_shapes=[
                pltpu.VMEM((1, C, LANE), jnp.float32),   # running sum
                pltpu.VMEM((1, C, LANE), jnp.float32),   # running max
            ],
        ),
        compiler_params=pltpu.CompilerParams(
            dimension_semantics=("parallel", "arbitrary"),
            vmem_limit_bytes=vmem_limit,
        ),
    )(x_flat, w1, b1, w2, b2)

    return out.reshape(B, C, 1, 1)


def _reference(x, w1, b1, w2, b2):
    avg_p = jnp.mean(x, axis=(2, 3))
    max_p = jnp.max(x, axis=(2, 3))

    def mlp(p):
        return jnp.maximum(p @ w1 + b1, 0.0) @ w2 + b2

    sig = jax.nn.sigmoid(mlp(avg_p) + mlp(max_p))
    return sig.reshape(x.shape[0], x.shape[1], 1, 1)


if __name__ == "__main__":
    # Module config: n_channels_in=4, reduction_ratio=2 -> middle_layer_size=2
    B, C, H, W = 2, 4, 16, 16
    reduction_ratio = 2
    mid = max(1, C // reduction_ratio)

    key = jax.random.PRNGKey(0)
    kx, k1, k2, k3, k4, kx2, kx3, k5, k6, k7, k8 = jax.random.split(key, 11)

    x = jax.random.normal(kx, (B, C, H, W), dtype=jnp.float32)

    # Deterministic parameter init (uniform, like nn.Linear's default range).
    bound1 = 1.0 / (C ** 0.5)
    w1 = jax.random.uniform(k1, (C, mid), jnp.float32, -bound1, bound1)
    b1 = jax.random.uniform(k2, (1, mid), jnp.float32, -bound1, bound1)
    bound2 = 1.0 / (mid ** 0.5)
    w2 = jax.random.uniform(k3, (mid, C), jnp.float32, -bound2, bound2)
    b2 = jax.random.uniform(k4, (1, C), jnp.float32, -bound2, bound2)

    ref = _reference(x, w1, b1, w2, b2)

    # (1) hw_tile=128 -> 2 HW grid steps: streamed accumulation path.
    out = jax.block_until_ready(channel_attention(x, w1, b1, w2, b2, hw_tile=128))
    assert out.shape == (B, C, 1, 1)
    assert jnp.allclose(out, ref, atol=1e-5), "mismatch vs reference"

    # (2) default byte-target tiling -> single HW step.
    out_d = jax.block_until_ready(channel_attention(x, w1, b1, w2, b2))
    assert jnp.allclose(out_d, ref, atol=1e-5), "mismatch vs reference (default tile)"

    # (3) ragged spatial size (H*W=225): partial trailing block + in-kernel tail
    #     mask, with no wrapper-side padding copy.
    x2 = jax.random.normal(kx2, (3, C, 15, 15), dtype=jnp.float32)
    out2 = jax.block_until_ready(channel_attention(x2, w1, b1, w2, b2, hw_tile=128))
    ref2 = _reference(x2, w1, b1, w2, b2)
    assert jnp.allclose(out2, ref2, atol=1e-5), "mismatch vs reference (ragged)"

    # (4) larger spatial extent (H*W=4096, C=8): exercises the fori_loop
    #     chunk-pair accumulation path inside a single big tile.
    C3 = 8
    mid3 = max(1, C3 // reduction_ratio)
    x3 = jax.random.normal(kx3, (2, C3, 64, 64), dtype=jnp.float32)
    bound1c = 1.0 / (C3 ** 0.5)
    w1_3 = jax.random.uniform(k5, (C3, mid3), jnp.float32, -bound1c, bound1c)
    b1_3 = jax.random.uniform(k6, (1, mid3), jnp.float32, -bound1c, bound1c)
    bound2c = 1.0 / (mid3 ** 0.5)
    w2_3 = jax.random.uniform(k7, (mid3, C3), jnp.float32, -bound2c, bound2c)
    b2_3 = jax.random.uniform(k8, (1, C3), jnp.float32, -bound2c, bound2c)
    out3 = jax.block_until_ready(channel_attention(x3, w1_3, b1_3, w2_3, b2_3))
    ref3 = _reference(x3, w1_3, b1_3, w2_3, b2_3)
    assert jnp.allclose(out3, ref3, atol=1e-5), "mismatch vs reference (large HW)"

    print("KERNEL_OK")
</pallas_src>

<mosaic_0001>
module attributes {stable_mosaic.version = 11 : i64} {
  func.func @channel_attention_kernel(%arg0: i32, %arg1: i32, %arg2: memref<1x4x128xf32, #tpu.memory_space<vmem>>, %arg3: memref<4x2xf32, #tpu.memory_space<vmem>>, %arg4: memref<1x2xf32, #tpu.memory_space<vmem>>, %arg5: memref<2x4xf32, #tpu.memory_space<vmem>>, %arg6: memref<1x4xf32, #tpu.memory_space<vmem>>, %arg7: memref<1x1x4xf32, #tpu.memory_space<vmem>>, %arg8: memref<1x4x128xf32, #tpu.memory_space<vmem>>, %arg9: memref<1x4x128xf32, #tpu.memory_space<vmem>>) attributes {dimension_semantics = [#tpu.dimension_semantics<parallel>, #tpu.dimension_semantics<arbitrary>], iteration_bounds = array<i64: 2, 2>, scalar_prefetch = 0 : i64, scratch_operands = 2 : i64, tpu.core_type = #tpu.core_type<tc>, window_params = [{transform_indices = @transform_0, window_bounds = array<i64: 1, 4, 128>}, {pipeline_mode = #tpu.pipeline_mode<synchronous>, transform_indices = @transform_1, window_bounds = array<i64: 4, 2>}, {pipeline_mode = #tpu.pipeline_mode<synchronous>, transform_indices = @transform_2, window_bounds = array<i64: 1, 2>}, {pipeline_mode = #tpu.pipeline_mode<synchronous>, transform_indices = @transform_3, window_bounds = array<i64: 2, 4>}, {pipeline_mode = #tpu.pipeline_mode<synchronous>, transform_indices = @transform_4, window_bounds = array<i64: 1, 4>}, {transform_indices = @transform_5, window_bounds = array<i64: 1, 1, 4>}]} {
    %c0_i32 = arith.constant 0 : i32
    %0 = arith.cmpi eq, %arg1, %c0_i32 : i32
    %1 = arith.extui %0 : i1 to i32
    %c0_i32_0 = arith.constant 0 : i32
    %2 = arith.cmpi ne, %1, %c0_i32_0 : i32
    scf.if %2 {
      %cst = arith.constant 0.000000e+00 : f32
      %13 = vector.broadcast %cst : f32 to vector<1x4x128xf32>
      %c0_16 = arith.constant 0 : index
      %c0_17 = arith.constant 0 : index
      %c0_18 = arith.constant 0 : index
      %14 = vector.load %arg8[%c0_16, %c0_17, %c0_18] : memref<1x4x128xf32, #tpu.memory_space<vmem>>, vector<1x4x128xf32>
      tpu.vector_store %arg8[%c0_16, %c0_17, %c0_18], %13 {strides = array<i32>} : memref<1x4x128xf32, #tpu.memory_space<vmem>>, vector<1x4x128xf32>,
      %cst_19 = arith.constant 0xFF800000 : f32
      %15 = vector.broadcast %cst_19 : f32 to vector<1x4x128xf32>
      %c0_20 = arith.constant 0 : index
      %c0_21 = arith.constant 0 : index
      %c0_22 = arith.constant 0 : index
      %16 = vector.load %arg9[%c0_20, %c0_21, %c0_22] : memref<1x4x128xf32, #tpu.memory_space<vmem>>, vector<1x4x128xf32>
      tpu.vector_store %arg9[%c0_20, %c0_21, %c0_22], %15 {strides = array<i32>} : memref<1x4x128xf32, #tpu.memory_space<vmem>>, vector<1x4x128xf32>,
    } else {
    }
    %c0 = arith.constant 0 : index
    %c0_1 = arith.constant 0 : index
    %c0_2 = arith.constant 0 : index
    %3 = vector.load %arg2[%c0, %c0_1, %c0_2] : memref<1x4x128xf32, #tpu.memory_space<vmem>>, vector<1x4x128xf32>
    %c0_3 = arith.constant 0 : index
    %c0_4 = arith.constant 0 : index
    %c0_5 = arith.constant 0 : index
    %4 = vector.load %arg8[%c0_3, %c0_4, %c0_5] : memref<1x4x128xf32, #tpu.memory_space<vmem>>, vector<1x4x128xf32>
    %5 = arith.addf %4, %3 : vector<1x4x128xf32>
    %c0_6 = arith.constant 0 : index
    %c0_7 = arith.constant 0 : index
    %c0_8 = arith.constant 0 : index
    %6 = vector.load %arg8[%c0_6, %c0_7, %c0_8] : memref<1x4x128xf32, #tpu.memory_space<vmem>>, vector<1x4x128xf32>
    tpu.vector_store %arg8[%c0_6, %c0_7, %c0_8], %5 {strides = array<i32>} : memref<1x4x128xf32, #tpu.memory_space<vmem>>, vector<1x4x128xf32>,
    %c0_9 = arith.constant 0 : index
    %c0_10 = arith.constant 0 : index
    %c0_11 = arith.constant 0 : index
    %7 = vector.load %arg9[%c0_9, %c0_10, %c0_11] : memref<1x4x128xf32, #tpu.memory_space<vmem>>, vector<1x4x128xf32>
    %8 = arith.maximumf %7, %3 : vector<1x4x128xf32>
    %c0_12 = arith.constant 0 : index
    %c0_13 = arith.constant 0 : index
    %c0_14 = arith.constant 0 : index
    %9 = vector.load %arg9[%c0_12, %c0_13, %c0_14] : memref<1x4x128xf32, #tpu.memory_space<vmem>>, vector<1x4x128xf32>
    tpu.vector_store %arg9[%c0_12, %c0_13, %c0_14], %8 {strides = array<i32>} : memref<1x4x128xf32, #tpu.memory_space<vmem>>, vector<1x4x128xf32>,
    %c1_i32 = arith.constant 1 : i32
    %10 = arith.cmpi eq, %arg1, %c1_i32 : i32
    %11 = arith.extui %10 : i1 to i32
    %c0_i32_15 = arith.constant 0 : i32
    %12 = arith.cmpi ne, %11, %c0_i32_15 : i32
    scf.if %12 {
      %c0_16 = arith.constant 0 : index
      %c0_17 = arith.constant 0 : index
      %c0_18 = arith.constant 0 : index
      %13 = vector.load %arg8[%c0_16, %c0_17, %c0_18] : memref<1x4x128xf32, #tpu.memory_space<vmem>>, vector<1x4x128xf32>
      %cst = arith.constant dense<0.000000e+00> : vector<1x4xf32>
      %14 = vector.multi_reduction <add>, %13, %cst [2] : vector<1x4x128xf32> to vector<1x4xf32>
      %cst_19 = arith.constant 2.560000e+02 : f32
      %15 = vector.broadcast %cst_19 : f32 to vector<1x4xf32>
      %16 = arith.divf %14, %15 : vector<1x4xf32>
      %c0_20 = arith.constant 0 : index
      %c0_21 = arith.constant 0 : index
      %c0_22 = arith.constant 0 : index
      %17 = vector.load %arg9[%c0_20, %c0_21, %c0_22] : memref<1x4x128xf32, #tpu.memory_space<vmem>>, vector<1x4x128xf32>
      %cst_23 = arith.constant dense<0xFF800000> : vector<1x4xf32>
      %18 = vector.multi_reduction <maximumf>, %17, %cst_23 [2] : vector<1x4x128xf32> to vector<1x4xf32>
      %19 = tpu.iota {dimensions = array<i32: 0>} : vector<2x4xi32>
      %c0_i32_24 = arith.constant 0 : i32
      %20 = vector.broadcast %c0_i32_24 : i32 to vector<2x4xi32>
      %21 = arith.cmpi eq, %19, %20 : vector<2x4xi32>
      %22 = vector.shape_cast %16 : vector<1x4xf32> to vector<1x4xf32>
      %23 = vector.broadcast %22 : vector<1x4xf32> to vector<2x4xf32>
      %24 = vector.shape_cast %18 : vector<1x4xf32> to vector<1x4xf32>
      %25 = vector.broadcast %24 : vector<1x4xf32> to vector<2x4xf32>
      %26 = arith.select %21, %23, %25 : vector<2x4xi1>, vector<2x4xf32>
      %c0_25 = arith.constant 0 : index
      %c0_26 = arith.constant 0 : index
      %27 = vector.load %arg3[%c0_25, %c0_26] : memref<4x2xf32, #tpu.memory_space<vmem>>, vector<4x2xf32>
      %cst_27 = arith.constant dense<0.000000e+00> : vector<2x2xf32>
      %28 = tpu.matmul %26, %27, %cst_27 {dimension_numbers = #tpu.dot_dimension_numbers<[1], [0], [0], [1], [0, 0, 1, 1], [], []>} : vector<2x4xf32>, vector<4x2xf32>, vector<2x2xf32> -> vector<2x2xf32>
      %c0_28 = arith.constant 0 : index
      %c0_29 = arith.constant 0 : index
      %29 = vector.load %arg4[%c0_28, %c0_29] : memref<1x2xf32, #tpu.memory_space<vmem>>, vector<1x2xf32>
      %30 = vector.broadcast %29 : vector<1x2xf32> to vector<2x2xf32>
      %31 = arith.addf %28, %30 : vector<2x2xf32>
      %cst_30 = arith.constant 0.000000e+00 : f32
      %32 = vector.broadcast %cst_30 : f32 to vector<2x2xf32>
      %33 = arith.maximumf %31, %32 : vector<2x2xf32>
      %c0_31 = arith.constant 0 : index
      %c0_32 = arith.constant 0 : index
      %34 = vector.load %arg5[%c0_31, %c0_32] : memref<2x4xf32, #tpu.memory_space<vmem>>, vector<2x4xf32>
      %cst_33 = arith.constant dense<0.000000e+00> : vector<2x4xf32>
      %35 = tpu.matmul %33, %34, %cst_33 {dimension_numbers = #tpu.dot_dimension_numbers<[1], [0], [0], [1], [0, 0, 1, 1], [], []>} : vector<2x2xf32>, vector<2x4xf32>, vector<2x4xf32> -> vector<2x4xf32>
      %c0_34 = arith.constant 0 : index
      %c0_35 = arith.constant 0 : index
      %36 = vector.load %arg6[%c0_34, %c0_35] : memref<1x4xf32, #tpu.memory_space<vmem>>, vector<1x4xf32>
      %37 = vector.broadcast %36 : vector<1x4xf32> to vector<2x4xf32>
      %38 = arith.addf %35, %37 : vector<2x4xf32>
      %cst_36 = arith.constant dense<0.000000e+00> : vector<4xf32>
      %39 = vector.multi_reduction <add>, %38, %cst_36 [0] : vector<2x4xf32> to vector<4xf32>
      %40 = vector.shape_cast %39 : vector<4xf32> to vector<1x4xf32>
      %41 = arith.negf %40 : vector<1x4xf32>
      %42 = math.exp %41 : vector<1x4xf32>
      %cst_37 = arith.constant 1.000000e+00 : f32
      %43 = vector.broadcast %cst_37 : f32 to vector<1x4xf32>
      %44 = arith.addf %43, %42 : vector<1x4xf32>
      %45 = arith.divf %43, %44 : vector<1x4xf32>
      %46 = vector.shape_cast %45 : vector<1x4xf32> to vector<1x1x4xf32>
      %c0_38 = arith.constant 0 : index
      %c0_39 = arith.constant 0 : index
      %c0_40 = arith.constant 0 : index
      %47 = vector.load %arg7[%c0_38, %c0_39, %c0_40] : memref<1x1x4xf32, #tpu.memory_space<vmem>>, vector<1x1x4xf32>
      tpu.vector_store %arg7[%c0_38, %c0_39, %c0_40], %46 {strides = array<i32>} : memref<1x1x4xf32, #tpu.memory_space<vmem>>, vector<1x1x4xf32>,
    } else {
    }
    return
  }
  func.func @transform_0(%arg0: i32, %arg1: i32) -> (i32, i32, i32) {
    %c0_i32 = arith.constant 0 : i32
    %c0_i32_0 = arith.constant 0 : i32
    return %arg0, %c0_i32, %arg1 : i32, i32, i32
  }
  func.func @transform_1(%arg0: i32, %arg1: i32) -> (i32, i32) {
    %c0_i32 = arith.constant 0 : i32
    %c0_i32_0 = arith.constant 0 : i32
    %c0_i32_1 = arith.constant 0 : i32
    return %c0_i32, %c0_i32_0 : i32, i32
  }
  func.func @transform_2(%arg0: i32, %arg1: i32) -> (i32, i32) {
    %c0_i32 = arith.constant 0 : i32
    %c0_i32_0 = arith.constant 0 : i32
    %c0_i32_1 = arith.constant 0 : i32
    return %c0_i32, %c0_i32_0 : i32, i32
  }
  func.func @transform_3(%arg0: i32, %arg1: i32) -> (i32, i32) {
    %c0_i32 = arith.constant 0 : i32
    %c0_i32_0 = arith.constant 0 : i32
    %c0_i32_1 = arith.constant 0 : i32
    return %c0_i32, %c0_i32_0 : i32, i32
  }
  func.func @transform_4(%arg0: i32, %arg1: i32) -> (i32, i32) {
    %c0_i32 = arith.constant 0 : i32
    %c0_i32_0 = arith.constant 0 : i32
    %c0_i32_1 = arith.constant 0 : i32
    return %c0_i32, %c0_i32_0 : i32, i32
  }
  func.func @transform_5(%arg0: i32, %arg1: i32) -> (i32, i32, i32) {
    %c0_i32 = arith.constant 0 : i32
    %c0_i32_0 = arith.constant 0 : i32
    %c0_i32_1 = arith.constant 0 : i32
    return %arg0, %c0_i32, %c0_i32_0 : i32, i32, i32
  }
}

</mosaic_0001>

<llo_original>
// kernel: tpu_custom_call.1
$region0: #{tpu_custom_call.1}
  #allocation0 [shape = 'u32[]', space=smem, size = 0x4, offset = 0x4, fixed_abs, tag = 'smem constant byte address 0x4 - core index']
  #allocation1 [shape = 'u32[72,128]{1,0:T(1,128)}', space=vmem, size = 0x9000, scoped, tag = 'internal scratch']
  #allocation2 [shape = 'f32[1,4,128]{2,1,0:T(4,128)}', space=vmem, size = 0x800, scoped, tag = 'scratch operand']
  #allocation3 [shape = 'f32[1,4,128]{2,1,0:T(4,128)}', space=vmem, size = 0x800, scoped, tag = 'scratch operand']
  %s0 = inlined_call_operand.hbm [shape: f32[2,4,256], index: 0, kind: input, shape index: {}]
  %s1 = inlined_call_operand.vmem [shape: f32[4,2], index: 1, kind: input, shape index: {}]
  %s2 = inlined_call_operand.vmem [shape: f32[1,2], index: 2, kind: input, shape index: {}]
  %s3 = inlined_call_operand.vmem [shape: f32[2,4], index: 3, kind: input, shape index: {}]
  %s4 = inlined_call_operand.vmem [shape: f32[1,4], index: 4, kind: input, shape index: {}]
  %s5 = inlined_call_operand.hbm [shape: f32[2,1,4], index: 5, kind: output, shape index: {}]
  %s6 = sld [smem:[#allocation0]]
  $region65: #{tpu_custom_call.1} parent=0
    _
  %s8 = ssub.s32 1, %s6
  %s9 = scalar_select 0, %s8, %s6
  $region1: #{tpu_custom_call.1} parent=0
    #allocation4 [shape = 'u8[4096]{0}', space=vmem, size = 0x1000, scoped, tag = 'input window, operand 0']
    #allocation5 [shape = 's32[2]{0}', space=sflag, size = 0x8, scoped, tag = 'scoped memory for tpu_custom_call.1']
    #allocation6 [shape = 's32[2]{0}', space=sflag, size = 0x8, scoped, tag = 'scoped memory for tpu_custom_call.1']
    #allocation7 [shape = 'u8[1024]{0}', space=vmem, size = 0x400, scoped, tag = 'output window, operand 0']
    %10 = vsyncpa [#allocation5], 0
    %s11 = scalar_lea.sflag [#allocation5], 1
    %12 = vsyncpa %s11, 0
    %13 = vsyncpa [#allocation6], 0
    %s14 = scalar_lea.sflag [#allocation6], 1
    %15 = vsyncpa %s14, 0
    loop: start=0, step=1, limit=6
    $region2: #{tpu_custom_call.1} parent=1 // loop_pre_header
      _
    $region3: #{tpu_custom_call.1} parent=1 // loop_header
      %s17 = sphi 0, %s21
      %p18 = scmp.ge.s32.totalorder %s17, 6
      %s24 = sphi 0, %s36
      %s25 = sphi 0, %s32
      %s26 = sphi 0, %s24
      %s27 = sphi 0, %s25
      %s28 = sphi 0, %s26
      %s29 = sphi 0, %s27
      %s41 = sphi 0, %s43
      %s44 = sphi 0, %s41
      %s45 = sphi 0, %s44
      %s61 = sphi 0, %s45
      %s65 = sphi 0, %s65
      %s67 = sphi 0, %s65
      %s68 = sphi 0, %s67
      %s82 = sphi 0, %s68
      %s86 = sphi 0, %s86
      %s88 = sphi 0, %s86
      %s89 = sphi 0, %s88
      %s103 = sphi 0, %s89
      %s107 = sphi 0, %s107
      %s109 = sphi 0, %s107
      %s110 = sphi 0, %s109
      %s124 = sphi 0, %s110
      %s128 = sphi 0, %s128
      %s130 = sphi 0, %s128
      %s131 = sphi 0, %s130
      %s145 = sphi 0, %s131
      %s151 = sphi 0, %s153
      %s154 = sphi 0, %s151
      %s155 = sphi 0, %s154
      %s171 = sphi 0, %s155
    $region4: #{tpu_custom_call.1} parent=1 // loop_header_branch
      %20 = sbr.rel (%p18) target = $region8
    $region5: #{tpu_custom_call.1} parent=1 // loop_body
      %s22 = ssub.s32 %s17, 1
      %s23 = ssub.s32 %s17, 2
      %s30 = sadd.s32 1, %s25
      %p31 = scmp.ge.s32.totalorder %s30, 2
      %s32 = scalar_select %p31, 0, %s30
      %s33 = sadd.s32 1, %s24
      %s34 = scalar_select %p31, %s33, %s24
      %p35 = scmp.ge.s32.totalorder %s34, 2
      %s36 = scalar_select %p35, 0, %s34
      %s37 = ssub.s32 %s24, %s36
      %s38 = ssub.s32 %s25, %s32
      %s39 = sor.u32 %s37, %s38
      %p40 = scmp.eq.s32.totalorder %s39, 0
      %s42 = sadd.s32 %s41, 1
      %s43 = scalar_select %p40, %s41, %s42
      %p46 = pneg %p40
      %p47 = scmp.eq.s32.totalorder %s17, 3
      %p48 = por %p46, %p47
      %p49 = scmp.ne.s32.totalorder %s41, %s44
      %p50 = scmp.eq.s32.totalorder %s17, 0
      %p51 = por %p49, %p50
      %p52 = scmp.ne.s32.totalorder %s41, %s44
      %p53 = scmp.eq.s32.totalorder %s22, 3
      %p54 = por %p52, %p53
      %p55 = scmp.ne.s32.totalorder %s44, %s45
      %p56 = scmp.eq.s32.totalorder %s22, 0
      %p57 = por %p55, %p56
      %p58 = scmp.ne.s32.totalorder %s44, %s45
      %p59 = scmp.eq.s32.totalorder %s23, 3
      %p60 = por %p58, %p59
      %p62 = scmp.ne.s32.totalorder %s45, %s61
      %p63 = scmp.eq.s32.totalorder %s23, 0
      %p64 = por %p62, %p63
      %s66 = sadd.s32 %s65, 1
      %p69 = scmp.eq.s32.totalorder %s17, 3
      %p70 = scmp.ne.s32.totalorder %s65, %s67
      %p71 = scmp.eq.s32.totalorder %s17, 0
      %p72 = por %p70, %p71
      %p73 = scmp.ne.s32.totalorder %s65, %s67
      %p74 = scmp.eq.s32.totalorder %s22, 3
      %p75 = por %p73, %p74
      %p76 = scmp.ne.s32.totalorder %s67, %s68
      %p77 = scmp.eq.s32.totalorder %s22, 0
      %p78 = por %p76, %p77
      %p79 = scmp.ne.s32.totalorder %s67, %s68
      %p80 = scmp.eq.s32.totalorder %s23, 3
      %p81 = por %p79, %p80
      %p83 = scmp.ne.s32.totalorder %s68, %s82
      %p84 = scmp.eq.s32.totalorder %s23, 0
      %p85 = por %p83, %p84
      %s87 = sadd.s32 %s86, 1
      %p90 = scmp.eq.s32.totalorder %s17, 3
      %p91 = scmp.ne.s32.totalorder %s86, %s88
      %p92 = scmp.eq.s32.totalorder %s17, 0
      %p93 = por %p91, %p92
      %p94 = scmp.ne.s32.totalorder %s86, %s88
      %p95 = scmp.eq.s32.totalorder %s22, 3
      %p96 = por %p94, %p95
      %p97 = scmp.ne.s32.totalorder %s88, %s89
      %p98 = scmp.eq.s32.totalorder %s22, 0
      %p99 = por %p97, %p98
      %p100 = scmp.ne.s32.totalorder %s88, %s89
      %p101 = scmp.eq.s32.totalorder %s23, 3
      %p102 = por %p100, %p101
      %p104 = scmp.ne.s32.totalorder %s89, %s103
      %p105 = scmp.eq.s32.totalorder %s23, 0
      %p106 = por %p104, %p105
      %s108 = sadd.s32 %s107, 1
      %p111 = scmp.eq.s32.totalorder %s17, 3
      %p112 = scmp.ne.s32.totalorder %s107, %s109
      %p113 = scmp.eq.s32.totalorder %s17, 0
      %p114 = por %p112, %p113
      %p115 = scmp.ne.s32.totalorder %s107, %s109
      %p116 = scmp.eq.s32.totalorder %s22, 3
      %p117 = por %p115, %p116
      %p118 = scmp.ne.s32.totalorder %s109, %s110
      %p119 = scmp.eq.s32.totalorder %s22, 0
      %p120 = por %p118, %p119
      %p121 = scmp.ne.s32.totalorder %s109, %s110
      %p122 = scmp.eq.s32.totalorder %s23, 3
      %p123 = por %p121, %p122
      %p125 = scmp.ne.s32.totalorder %s110, %s124
      %p126 = scmp.eq.s32.totalorder %s23, 0
      %p127 = por %p125, %p126
      %s129 = sadd.s32 %s128, 1
      %p132 = scmp.eq.s32.totalorder %s17, 3
      %p133 = scmp.ne.s32.totalorder %s128, %s130
      %p134 = scmp.eq.s32.totalorder %s17, 0
      %p135 = por %p133, %p134
      %p136 = scmp.ne.s32.totalorder %s128, %s130
      %p137 = scmp.eq.s32.totalorder %s22, 3
      %p138 = por %p136, %p137
      %p139 = scmp.ne.s32.totalorder %s130, %s131
      %p140 = scmp.eq.s32.totalorder %s22, 0
      %p141 = por %p139, %p140
      %p142 = scmp.ne.s32.totalorder %s130, %s131
      %p143 = scmp.eq.s32.totalorder %s23, 3
      %p144 = por %p142, %p143
      %p146 = scmp.ne.s32.totalorder %s131, %s145
      %p147 = scmp.eq.s32.totalorder %s23, 0
      %p148 = por %p146, %p147
      %s149 = ssub.s32 %s24, %s36
      %p150 = scmp.eq.s32.totalorder %s149, 0
      %s152 = sadd.s32 %s151, 1
      %s153 = scalar_select %p150, %s151, %s152
      %p156 = pneg %p150
      %p157 = scmp.eq.s32.totalorder %s17, 3
      %p158 = por %p156, %p157
      %p159 = scmp.ne.s32.totalorder %s151, %s154
      %p160 = scmp.eq.s32.totalorder %s17, 0
      %p161 = por %p159, %p160
      %p162 = scmp.ne.s32.totalorder %s151, %s154
      %p163 = scmp.eq.s32.totalorder %s22, 3
      %p164 = por %p162, %p163
      %p165 = scmp.ne.s32.totalorder %s154, %s155
      %p166 = scmp.eq.s32.totalorder %s22, 0
      %p167 = por %p165, %p166
      %p168 = scmp.ne.s32.totalorder %s154, %s155
      %p169 = scmp.eq.s32.totalorder %s23, 3
      %p170 = por %p168, %p169
      %p172 = scmp.ne.s32.totalorder %s155, %s171
      %p173 = scmp.eq.s32.totalorder %s23, 0
      %p174 = por %p172, %p173
      %p175 = scmp.le.s32.totalorder 1, %s17
      %p176 = scmp.lt.s32.totalorder %s17, 5
      %p177 = pnand %p175, %p176
      %p178 = pneg %p177
      // Predicated region
      $region9: #{tpu_custom_call.1} parent=5 // pred_check
        _
      $region10: #{tpu_custom_call.1} parent=5 // pred_check_branch
        %180 = sbr.rel (%p177) target = $region12
      $region11: #{tpu_custom_call.1} parent=5 // pred_region
        %s181 = ssub.s32 %s17, 1
        // Predicated region
        $region13: #{tpu_custom_call.1} parent=11 // pred_check
          %p182 = pneg %p78
        $region14: #{tpu_custom_call.1} parent=11 // pred_check_branch
          %184 = sbr.rel (%p182) target = $region16
        $region15: #{tpu_custom_call.1} parent=11 // pred_region
          _
        $region16: #{tpu_custom_call.1} parent=11 // pred_fallthru
          _
        // Predicated region
        $region17: #{tpu_custom_call.1} parent=11 // pred_check
          %p185 = pneg %p99
        $region18: #{tpu_custom_call.1} parent=11 // pred_check_branch
          %187 = sbr.rel (%p185) target = $region20
        $region19: #{tpu_custom_call.1} parent=11 // pred_region
          _
        $region20: #{tpu_custom_call.1} parent=11 // pred_fallthru
          _
        // Predicated region
        $region21: #{tpu_custom_call.1} parent=11 // pred_check
          %p188 = pneg %p120
        $region22: #{tpu_custom_call.1} parent=11 // pred_check_branch
          %190 = sbr.rel (%p188) target = $region24
        $region23: #{tpu_custom_call.1} parent=11 // pred_region
          _
        $region24: #{tpu_custom_call.1} parent=11 // pred_fallthru
          _
        // Predicated region
        $region25: #{tpu_custom_call.1} parent=11 // pred_check
          %p191 = pneg %p141
        $region26: #{tpu_custom_call.1} parent=11 // pred_check_branch
          %193 = sbr.rel (%p191) target = $region28
        $region27: #{tpu_custom_call.1} parent=11 // pred_region
          _
        $region28: #{tpu_custom_call.1} parent=11 // pred_fallthru
          _
      $region12: #{tpu_custom_call.1} parent=5 // pred_fallthru
        _
      %p194 = scmp.lt.s32.totalorder %s17, 4
      // Predicated region
      $region29: #{tpu_custom_call.1} parent=5 // pred_check
        %p195 = pneg %p194
      $region30: #{tpu_custom_call.1} parent=5 // pred_check_branch
        %197 = sbr.rel (%p195) target = $region32
      $region31: #{tpu_custom_call.1} parent=5 // pred_region
        // Predicated region
        $region33: #{tpu_custom_call.1} parent=31 // pred_check
          %p198 = pneg %p51
        $region34: #{tpu_custom_call.1} parent=31 // pred_check_branch
          %200 = sbr.rel (%p198) target = $region36
        $region35: #{tpu_custom_call.1} parent=31 // pred_region
          %s201 = sand.u32 %s41, 1
          %s202 = scalar_lea.sflag [#allocation5], %s201
          %s203 = sand.u32 %s41, 1
          %s204 = smul.addr %s203, 4
          %s205 = scalar_lea.vmem [#allocation4], %s204
          %207 = vsyncadd %s202, 0
          %s208 = smul.addr %s24, 2
          %s209 = sadd.s32 %s25, %s208
          %s210 = smul.addr %s209, 4
          %s211 = scalar_lea.hbm %s0, %s210
          %s213 = sshll.u32 %s211, 4
          %s214 = int_to_ptr.hbm [resolvable:$true] %s213
          %s215 = sshll.u32 %s205, 4
          %s216 = int_to_ptr.vmem [resolvable:$true] %s215
          %218 = dma.hbm_to_vmem [thread:$0]  %s214, 64, %s216, %s202
        $region36: #{tpu_custom_call.1} parent=31 // pred_fallthru
          _
      $region32: #{tpu_custom_call.1} parent=5 // pred_fallthru
        _
      %p219 = scmp.le.s32.totalorder 1, %s17
      %p220 = scmp.lt.s32.totalorder %s17, 5
      %p221 = pnand %p219, %p220
      %p222 = pneg %p221
      // Predicated region
      $region37: #{tpu_custom_call.1} parent=5 // pred_check
        _
      $region38: #{tpu_custom_call.1} parent=5 // pred_check_branch
        %224 = sbr.rel (%p221) target = $region40
      $region39: #{tpu_custom_call.1} parent=5 // pred_region
        %s225 = ssub.s32 %s17, 1
        %s226 = sand.u32 %s44, 1
        %s227 = scalar_lea.sflag [#allocation5], %s226
        %s228 = sand.u32 %s44, 1
        %s229 = smul.addr %s228, 4
        %s230 = scalar_lea.vmem [#allocation4], %s229
        // Predicated region
        $region41: #{tpu_custom_call.1} parent=39 // pred_check
          %p231 = pneg %p57
        $region42: #{tpu_custom_call.1} parent=39 // pred_check_branch
          %233 = sbr.rel (%p231) target = $region44
        $region43: #{tpu_custom_call.1} parent=39 // pred_region
          %235 = dma.done %s227, 64
        $region44: #{tpu_custom_call.1} parent=39 // pred_fallthru
          _
        %s236 = sand.u32 %s44, 1
        %s237 = scalar_lea.sflag [#allocation5], %s236
        %s238 = sand.u32 %s44, 1
        %s239 = smul.addr %s238, 4
        %s240 = scalar_lea.vmem [#allocation4], %s239
        %p241 = pneg %p57
        %p242 = pneg %p54
        %p243 = pneg %p78
        %p244 = pneg %p75
        %p245 = pneg %p99
        %p246 = pneg %p96
        %p247 = pneg %p120
        %p248 = pneg %p117
        %p249 = pneg %p141
        %p250 = pneg %p138
        %p251 = pneg %p167
        %p252 = pneg %p164
        %s253 = sand.u32 %s154, 1
        %s254 = scalar_lea.sflag [#allocation6], %s253
        %s255 = sand.u32 %s154, 1
        %s256 = scalar_lea.vmem [#allocation7], %s255
        %p257 = scmp.eq.s32.totalorder %s27, 0
        // Predicated region
        $region45: #{tpu_custom_call.1} parent=39 // pred_check
          %p258 = pneg %p257
        $region46: #{tpu_custom_call.1} parent=39 // pred_check_branch
          %260 = sbr.rel (%p258) target = $region48
        $region47: #{tpu_custom_call.1} parent=39 // pred_region
          %261 = vst [vmem:[#allocation2] sm:$0xf] 0.0
          %262 = vst [vmem:[#allocation3] sm:$0xf] -inf
        $region48: #{tpu_custom_call.1} parent=39 // pred_fallthru
          _
        %v263 = vld [vmem:[%s230] sm:$0xf]
        %v264 = vld [vmem:[#allocation2] sm:$0xf]
        %v265 = vadd.f32 %v264, %v263
        %266 = vst [vmem:[#allocation2] sm:$0xf] %v265
        %v267 = vld [vmem:[#allocation3] sm:$0xf]
        %v268 = vmax.f32 %v267, %v263
        %269 = vst [vmem:[#allocation3] sm:$0xf] %v268
        %p270 = scmp.eq.s32.totalorder %s27, 1
        // Predicated region
        $region49: #{tpu_custom_call.1} parent=39 // pred_check
          %p271 = pneg %p270
        $region50: #{tpu_custom_call.1} parent=39 // pred_check_branch
          %273 = sbr.rel (%p271) target = $region52
        $region51: #{tpu_custom_call.1} parent=39 // pred_region
          %v274 = vld [vmem:[#allocation2] sm:$0xf]
          %vm275 = vcmask 1043456
          %v276 = vsel %vm275, %v274, 0.0
          %277 = vadd.xlane.f32.xlu0 %v276
          %v278 = vpop.xlane.xlu0 %277
          %v279 = vrcp.pop 256.0
          %v280 = vmul.f32 256.0, %v279
          %v281 = vsub.f32 1.0, %v280
          %v282 = vmul.f32 %v279, %v281
          %v283 = vadd.f32 %v279, %v282
          %vm284 = vweird.f32 %v279
          %v285 = vsel %vm284, %v279, %v283
          %v286 = vmul.f32 %v278, %v285
          %v287 = vld [vmem:[#allocation3] sm:$0xf]
          %v288 = vsel %vm275, %v287, -inf
          %289 = vmax.xlane.f32.xlu0 %v288
          %v290 = vpop.xlane.xlu0 %289
          %v291 = vlaneseq
          %v292 = vshrl.u32 %v291, 7
          %vm293 = vcmp.eq.s32.totalorder %v292, 0
          %v295 = vlaneseq
          %v296 = vand.u32 %v295, 127
          %v297 = vperm.slane %v286, %v296
          %v300 = vperm.slane %v290, %v296
          %v302 = vsel %vm293, %v297, %v300
          %v303 = vld [vmem:[%s1] sm:$0xf]
          %v304 = vld [vmem:[%s2] sm:$0x1]
          %v306 = vperm.slane %v304, 0
          %vm308 = vcmask 31744
          %v310 = vsel %vm308, %v302, 0
          %v313 = vsel %vm275, %v303, 0
          %315 = vmatpush.msra.mxu0 0.0
          %316 = vmatpush.msra.mxu0 0.0
          %317 = vmatpush.msra.mxu0 0.0
          %318 = vmatpush.msra.mxu0 0.0
          %319 = vmatpush.msra.mxu0 0.0
          %320 = vmatpush.msra.mxu0 0.0
          %321 = vmatpush.msra.mxu0 0.0
          %322 = vmatpush.msra.mxu0 0.0
          %323 = vmatpush.msra.mxu0 0.0
          %324 = vmatpush.msra.mxu0 0.0
          %325 = vmatpush.msra.mxu0 0.0
          %326 = vmatpush.msra.mxu0 0.0
          %327 = vmatpush.msra.mxu0 0.0
          %328 = vmatpush.msra.mxu0 0.0
          %329 = vmatpush.msra.mxu0 0.0
          %330 = vmatpush.msra.mxu0 %v313
          %331 = vmatmul.f32.gmra.mxu0 %v310
          %v332 = vpop.f32.mrf.mxu0
          %v333 = vadd.f32 %v306, %v332
          %334 = vdwg.mxu0
          %v335 = vmax.f32 %v333, 0.0
          %v336 = vld [vmem:[%s3] sm:$0x3]
          %v337 = vld [vmem:[%s4] sm:$0x1]
          %v339 = vperm.slane %v337, 0
          %vm341 = vcmask 15360
          %v343 = vsel %vm341, %v335, 0
          %vm345 = vcmask 1041408
          %v347 = vsel %vm345, %v336, 0
          %349 = vmatpush.msra.mxu0 0.0
          %350 = vmatpush.msra.mxu0 0.0
          %351 = vmatpush.msra.mxu0 0.0
          %352 = vmatpush.msra.mxu0 0.0
          %353 = vmatpush.msra.mxu0 0.0
          %354 = vmatpush.msra.mxu0 0.0
          %355 = vmatpush.msra.mxu0 0.0
          %356 = vmatpush.msra.mxu0 0.0
          %357 = vmatpush.msra.mxu0 0.0
          %358 = vmatpush.msra.mxu0 0.0
          %359 = vmatpush.msra.mxu0 0.0
          %360 = vmatpush.msra.mxu0 0.0
          %361 = vmatpush.msra.mxu0 0.0
          %362 = vmatpush.msra.mxu0 0.0
          %363 = vmatpush.msra.mxu0 0.0
          %364 = vmatpush.msra.mxu0 %v347
          %365 = vmatmul.f32.gmra.mxu0 %v343
          %v366 = vpop.f32.mrf.mxu0
          %v367 = vadd.f32 %v339, %v366
          %368 = vdwg.mxu0
          %vm369 = vcmask 25600
          %v370 = vsel %vm369, %v367, 0.0
          %v371 = vrot.slane %v370, 4
          %v372 = vadd.f32 %v370, %v371
          %v373 = vrot.slane %v372, 2
          %v374 = vadd.f32 %v372, %v373
          %v375 = vrot.slane %v374, 1
          %v376 = vadd.f32 %v374, %v375
          %v377 = vxor.u32 %v376, 2147483648
          %v378 = vmul.f32 %v377, 1.442695
          %v379 = vpow.pop %v378
          %v380 = vadd.f32 %v379, 1.0
          %v381 = vrcp.pop %v380
          %v382 = vmul.f32 %v380, %v381
          %v383 = vsub.f32 1.0, %v382
          %v384 = vmul.f32 %v381, %v383
          %v385 = vadd.f32 %v381, %v384
          %vm386 = vweird.f32 %v380
          %vm387 = vweird.f32 %v381
          %vm388 = vmor %vm386, %vm387
          %v389 = vsel %vm388, %v381, %v385
          %v390 = vand.u32 2147483647, %v380
          %vm391 = vcmp.eq.f32.partialorder %v390, 8.507059e+37
          %v392 = vand.u32 %v380, 2147483648
          %v393 = vor.u32 1.1754944e-38, %v392
          %v394 = vsel %vm391, %v393, %v389
          %v395 = vmul.f32 1.0, %v394
          %vm396 = vcmask 24576
          %397 = vst.msk [vmem:[%s256] sm:$0x1] %vm396, %v395
        $region52: #{tpu_custom_call.1} parent=39 // pred_fallthru
          _
        %s398 = sand.u32 %s154, 1
        %s399 = scalar_lea.sflag [#allocation6], %s398
        %s400 = sand.u32 %s154, 1
        %s401 = scalar_lea.vmem [#allocation7], %s400
        // Predicated region
        $region53: #{tpu_custom_call.1} parent=39 // pred_check
          %p402 = pneg %p164
        $region54: #{tpu_custom_call.1} parent=39 // pred_check_branch
          %404 = sbr.rel (%p402) target = $region56
        $region55: #{tpu_custom_call.1} parent=39 // pred_region
          %406 = vsyncadd %s399, 0
          %s407 = scalar_lea.hbm %s5, %s26
          %s409 = sshll.u32 %s401, 4
          %s410 = int_to_ptr.vmem [resolvable:$true] %s409
          %s411 = sshll.u32 %s407, 4
          %s412 = int_to_ptr.hbm [resolvable:$true] %s411
          %414 = dma.vmem_to_hbm [thread:$0]  %s410, 16, %s412, %s399
        $region56: #{tpu_custom_call.1} parent=39 // pred_fallthru
          _
      $region40: #{tpu_custom_call.1} parent=5 // pred_fallthru
        _
      %p415 = scmp.le.s32.totalorder 2, %s17
      // Predicated region
      $region57: #{tpu_custom_call.1} parent=5 // pred_check
        %p416 = pneg %p415
      $region58: #{tpu_custom_call.1} parent=5 // pred_check_branch
        %418 = sbr.rel (%p416) target = $region60
      $region59: #{tpu_custom_call.1} parent=5 // pred_region
        %s419 = ssub.s32 %s17, 2
        // Predicated region
        $region61: #{tpu_custom_call.1} parent=59 // pred_check
          %p420 = pneg %p170
        $region62: #{tpu_custom_call.1} parent=59 // pred_check_branch
          %422 = sbr.rel (%p420) target = $region64
        $region63: #{tpu_custom_call.1} parent=59 // pred_region
          %s423 = sand.u32 %s155, 1
          %s424 = scalar_lea.sflag [#allocation6], %s423
          %s425 = sand.u32 %s155, 1
          %s426 = scalar_lea.vmem [#allocation7], %s425
          %428 = dma.done %s424, 16
        $region64: #{tpu_custom_call.1} parent=59 // pred_fallthru
          _
      $region60: #{tpu_custom_call.1} parent=5 // pred_fallthru
        _
    $region6: #{tpu_custom_call.1} parent=1 // loop_footer
      %s21 = sadd.s32 1, %s17
    $region7: #{tpu_custom_call.1} parent=1 // loop_footer_branch
      %16 = sbr.rel target = $region3
    $region8: #{tpu_custom_call.1} parent=1 // loop_exit
      _
    %429 = vsyncpa [#allocation5], 1
    %s430 = scalar_lea.sflag [#allocation5], 1
    %431 = vsyncpa %s430, 1
    %432 = vsyncpa [#allocation6], 1
    %s433 = scalar_lea.sflag [#allocation6], 1
    %434 = vsyncpa %s433, 1

</llo_original>
